<compile_context>
chip_gen: v5e
topology: v5e:2x2
jax: 0.10.0
libtpu: 0.0.40
codegen_flags: <defaults>
</compile_context>

<pallas_src>
import math
import functools

import jax
import jax.numpy as jnp
from jax.experimental import pallas as pl
from jax.experimental.pallas import tpu as pltpu


def _round_up(x: int, m: int) -> int:
    return ((x + m - 1) // m) * m


def make_support_and_mask(n_frames: int, n_segments: int):
    """Replicates PiecewiseBezier._create_support_and_mask with default modes."""
    assert n_frames >= 2 and 1 <= n_segments < n_frames
    modes = jnp.linspace(0.0, 1.0, n_segments + 1)[1:-1].reshape(1, -1)
    support = jnp.linspace(0.0, 1.0, n_frames).reshape(1, 1, -1)
    support = jnp.tile(support, (1, n_segments, 1))                     # (1, S, F)
    seg_starts = jnp.pad(modes, ((0, 0), (1, 0)), constant_values=0.0)[..., None]
    seg_ends = jnp.roll(seg_starts, shift=-1, axis=1)
    seg_ends = seg_ends.at[:, -1, :].set(1.0)
    seg_ranges = seg_ends - seg_starts
    mask = (support >= seg_starts) & (support < seg_ends)
    mask = mask.at[:, -1, -1].set(True)
    support = (support - seg_starts) / seg_ranges
    support = support * mask
    return support[0].astype(jnp.float32), mask[0].astype(jnp.float32)  # (S, F)


def make_basis_matrix(n_frames: int, n_segments: int, degree: int):
    """Masked Bernstein basis flattened to (K = n_segments*(degree+1), n_frames).

    Row s*(degree+1)+i holds bin(deg,i) * t^i * (1-t)^(deg-i) * mask for
    segment s; contracting cp (B, K) against it reproduces the PyTorch
    `create_bezier` + mask + segment-sum in a single matmul.
    """
    support, mask = make_support_and_mask(n_frames, n_segments)         # (S, F)
    bin_coeff = jnp.array([math.comb(degree, i) for i in range(degree + 1)],
                          jnp.float32)
    exp = jnp.arange(degree + 1, dtype=jnp.float32)
    t = support[:, :, None]                                             # (S, F, 1)
    basis = bin_coeff * t ** exp * (1.0 - t) ** (degree - exp)          # (S, F, D+1)
    basis = basis * mask[:, :, None]
    W = jnp.transpose(basis, (0, 2, 1)).reshape(n_segments * (degree + 1),
                                                n_frames)
    return W.astype(jnp.float32)


def _piecewise_bezier_kernel(cp_ref, w_ref, out_ref, *, eps, cp_are_logits):
    # cp_ref: (TB, K) | w_ref: (K, TF) | out_ref: (TB, TF)
    cp = cp_ref[...]
    if cp_are_logits:
        cpf = cp.astype(jnp.float32)
        cpf = jnp.tanh(cpf) * (1.0 - eps)
        cpf = cpf * 0.5 + 0.5
        cp = cpf.astype(cp_ref.dtype)
    out_ref[...] = jnp.dot(cp, w_ref[...],
                           preferred_element_type=jnp.float32
                           ).astype(out_ref.dtype)


def piecewise_bezier_forward(cp, n_frames, n_segments, degree,
                             cp_are_logits=False, eps=1e-3, use_bf16=False):
    """Equivalent of PiecewiseBezier.forward for 4-D cp input.

    cp: (bs, n_ch, n_segments, degree + 1)  ->  (bs, n_ch, n_frames)
    """
    assert cp.ndim == 4
    bs, n_ch, s, d1 = cp.shape
    assert s == n_segments and d1 == degree + 1
    B = bs * n_ch
    K = n_segments * (degree + 1)
    F = n_frames

    io_dtype = jnp.bfloat16 if use_bf16 else jnp.float32
    cp2d = cp.reshape(B, K).astype(io_dtype)              # row-major (segment, cp-idx)
    W = make_basis_matrix(n_frames, n_segments, degree).astype(io_dtype)

    # --- tile sizing -------------------------------------------------------
    # F tile: multiple of 128 for unmasked lane-dense stores.
    tf = min(1024, _round_up(F, 128))
    F_pad = _round_up(F, tf)
    # B tile: largest multiple of 8 under a conservative VMEM budget that is
    # safe across v5e/v6e (128 MiB) and v7x (64 MiB); double-buffered footprint
    # ~= 2*TB*K + 2*TB*TF + 2*K*TF elements.
    elem_bytes = 2 if use_bf16 else 4
    budget = 32 * 1024 * 1024
    fixed = 2 * K * tf * elem_bytes
    per_row = 2 * (K + tf) * elem_bytes
    tb = max(8, (budget - fixed) // per_row)
    tb = min(tb, 1024, _round_up(B, 8))
    tb = max(8, (tb // 8) * 8)
    B_pad = _round_up(B, tb)

    # --- pad to tile boundaries (sliced off afterwards) --------------------
    cp_p = jnp.zeros((B_pad, K), io_dtype).at[:B, :].set(cp2d)
    W_p = jnp.zeros((K, F_pad), io_dtype).at[:, :F].set(W)

    vmem_limit = int(min(48 * 1024 * 1024, fixed + tb * per_row + (8 << 20)))

    kernel = functools.partial(_piecewise_bezier_kernel, eps=eps,
                               cp_are_logits=cp_are_logits)

    out = pl.pallas_call(
        kernel,
        out_shape=jax.ShapeDtypeStruct((B_pad, F_pad), jnp.float32),
        grid=(B_pad // tb, F_pad // tf),
        in_specs=[
            pl.BlockSpec((tb, K), lambda i, j: (i, 0)),
            pl.BlockSpec((K, tf), lambda i, j: (0, j)),
        ],
        out_specs=pl.BlockSpec((tb, tf), lambda i, j: (i, j)),
        compiler_params=pltpu.CompilerParams(
            dimension_semantics=("parallel", "parallel"),
            vmem_limit_bytes=vmem_limit),
    )(cp_p, W_p)

    return out[:B, :F].reshape(bs, n_ch, n_frames)


def _reference(cp_flat, support, mask, degree, eps, cp_are_logits):
    """Pure-JAX transliteration of the PyTorch math, for validation."""
    p = cp_flat
    if cp_are_logits:
        p = jnp.tanh(p) * (1.0 - eps) * 0.5 + 0.5
    bin_coeff = jnp.array([math.comb(degree, i) for i in range(degree + 1)],
                          jnp.float32)
    exp = jnp.arange(degree + 1, dtype=jnp.float32)
    t = support[None, :, :, None]                               # (1, S, F, 1)
    basis = bin_coeff * t ** exp * (1.0 - t) ** (degree - exp)  # (1, S, F, D1)
    bez = (p[:, :, None, :] * basis).sum(-1)                    # (B, S, F)
    bez = bez * mask
    return bez.sum(axis=1)                                      # (B, F)


if __name__ == "__main__":
    bs, n_ch = 2, 4
    n_frames, n_segments, degree = 16, 4, 3

    key = jax.random.PRNGKey(0)
    cp = jax.random.normal(key, (bs, n_ch, n_segments, degree + 1),
                           dtype=jnp.float32)

    out = piecewise_bezier_forward(cp, n_frames, n_segments, degree,
                                   cp_are_logits=True)
    out = jax.block_until_ready(out)
    assert out.shape == (bs, n_ch, n_frames)

    # validate against a pure-JAX reference of the PyTorch semantics
    support, mask = make_support_and_mask(n_frames, n_segments)
    ref = _reference(cp.reshape(-1, n_segments, degree + 1), support, mask,
                     degree, 1e-3, True).reshape(bs, n_ch, n_frames)
    assert jnp.allclose(out, ref, atol=1e-5, rtol=1e-5)

    print("KERNEL_OK")
</pallas_src>

<mosaic_0001>
module attributes {stable_mosaic.version = 11 : i64} {
  func.func @_piecewise_bezier_kernel(%arg0: i32, %arg1: i32, %arg2: memref<8x16xf32, #tpu.memory_space<vmem>>, %arg3: memref<16x128xf32, #tpu.memory_space<vmem>>, %arg4: memref<8x128xf32, #tpu.memory_space<vmem>>) attributes {dimension_semantics = [#tpu.dimension_semantics<parallel>, #tpu.dimension_semantics<parallel>], iteration_bounds = array<i64: 1, 1>, scalar_prefetch = 0 : i64, scratch_operands = 0 : i64, tpu.core_type = #tpu.core_type<tc>, window_params = [{transform_indices = @transform_0, window_bounds = array<i64: 8, 16>}, {transform_indices = @transform_1, window_bounds = array<i64: 16, 128>}, {transform_indices = @transform_2, window_bounds = array<i64: 8, 128>}]} {
    %c0 = arith.constant 0 : index
    %c0_0 = arith.constant 0 : index
    %0 = vector.load %arg2[%c0, %c0_0] : memref<8x16xf32, #tpu.memory_space<vmem>>, vector<8x16xf32>
    %1 = math.tanh %0 : vector<8x16xf32>
    %cst = arith.constant 9.990000e-01 : f32
    %2 = vector.broadcast %cst : f32 to vector<8x16xf32>
    %3 = arith.mulf %1, %2 : vector<8x16xf32>
    %cst_1 = arith.constant 5.000000e-01 : f32
    %4 = vector.broadcast %cst_1 : f32 to vector<8x16xf32>
    %5 = arith.mulf %3, %4 : vector<8x16xf32>
    %cst_2 = arith.constant 5.000000e-01 : f32
    %6 = vector.broadcast %cst_2 : f32 to vector<8x16xf32>
    %7 = arith.addf %5, %6 : vector<8x16xf32>
    %c0_3 = arith.constant 0 : index
    %c0_4 = arith.constant 0 : index
    %8 = vector.load %arg3[%c0_3, %c0_4] : memref<16x128xf32, #tpu.memory_space<vmem>>, vector<16x128xf32>
    %cst_5 = arith.constant dense<0.000000e+00> : vector<8x128xf32>
    %9 = tpu.matmul %7, %8, %cst_5 {dimension_numbers = #tpu.dot_dimension_numbers<[1], [0], [0], [1], [0, 0, 1, 1], [], []>} : vector<8x16xf32>, vector<16x128xf32>, vector<8x128xf32> -> vector<8x128xf32>
    %c0_6 = arith.constant 0 : index
    %c0_7 = arith.constant 0 : index
    %10 = vector.load %arg4[%c0_6, %c0_7] : memref<8x128xf32, #tpu.memory_space<vmem>>, vector<8x128xf32>
    tpu.vector_store %arg4[%c0_6, %c0_7], %9 {strides = array<i32>} : memref<8x128xf32, #tpu.memory_space<vmem>>, vector<8x128xf32>,
    return
  }
  func.func @transform_0(%arg0: i32, %arg1: i32) -> (i32, i32) {
    %c0_i32 = arith.constant 0 : i32
    %c0_i32_0 = arith.constant 0 : i32
    return %arg0, %c0_i32 : i32, i32
  }
  func.func @transform_1(%arg0: i32, %arg1: i32) -> (i32, i32) {
    %c0_i32 = arith.constant 0 : i32
    %c0_i32_0 = arith.constant 0 : i32
    return %c0_i32, %arg1 : i32, i32
  }
  func.func @transform_2(%arg0: i32, %arg1: i32) -> (i32, i32) {
    %c0_i32 = arith.constant 0 : i32
    return %arg0, %arg1 : i32, i32
  }
}

</mosaic_0001>

<llo_original>
// kernel: tpu_custom_call.1
$region0: #{tpu_custom_call.1}
  #allocation0 [shape = 'u32[]', space=smem, size = 0x4, offset = 0x4, fixed_abs, tag = 'smem constant byte address 0x4 - core index']
  #allocation1 [shape = 'u32[72,128]{1,0:T(1,128)}', space=vmem, size = 0x9000, scoped, tag = 'internal scratch']
  %s0 = inlined_call_operand.hbm [shape: f32[8,16], index: 0, kind: input, shape index: {}]
  %s1 = inlined_call_operand.hbm [shape: f32[16,128], index: 1, kind: input, shape index: {}]
  %s2 = inlined_call_operand.hbm [shape: f32[8,128], index: 2, kind: output, shape index: {}]
  %s3 = sld [smem:[#allocation0]]
  $region26: #{tpu_custom_call.1} parent=0
    _
  %s5 = ssub.s32 1, %s3
  %s6 = scalar_select 0, %s5, %s3
  $region1: #{tpu_custom_call.1} parent=0
    #allocation2 [shape = 'u8[4096]{0}', space=vmem, size = 0x1000, scoped, tag = 'input window, operand 0, single buffered']
    #allocation3 [shape = 's32[1]{0}', space=sflag, size = 0x4, scoped, tag = 'scoped memory for tpu_custom_call.1']
    #allocation4 [shape = 's32[1]{0}', space=sflag, size = 0x4, scoped, tag = 'scoped memory for tpu_custom_call.1']
    #allocation5 [shape = 'u8[8192]{0}', space=vmem, size = 0x2000, scoped, tag = 'input window, operand 1, single buffered']
    #allocation6 [shape = 's32[1]{0}', space=sflag, size = 0x4, scoped, tag = 'scoped memory for tpu_custom_call.1']
    #allocation7 [shape = 'u8[4096]{0}', space=vmem, size = 0x1000, scoped, tag = 'output window, operand 0, single buffered']
    %7 = vsyncpa [#allocation3], 0
    %8 = vsyncpa [#allocation6], 0
    %9 = vsyncpa [#allocation4], 0
    // Predicated region
    $region2: #{tpu_custom_call.1} parent=1 // pred_check
      _
    $region3: #{tpu_custom_call.1} parent=1 // pred_check_branch
      %11 = sbr.rel (0) target = $region5
    $region4: #{tpu_custom_call.1} parent=1 // pred_region
      %13 = vsyncadd [#allocation3], 0
      %s15 = sshll.u32 %s0, 4
      %s16 = int_to_ptr.hbm [resolvable:$true] %s15
      %s17 = sshll.u32 [#allocation2], 4
      %s18 = int_to_ptr.vmem [resolvable:$true] %s17
      %20 = dma.hbm_to_vmem [thread:$0]  %s16, 128, %s18, [#allocation3]
    $region5: #{tpu_custom_call.1} parent=1 // pred_fallthru
      _
    // Predicated region
    $region6: #{tpu_custom_call.1} parent=1 // pred_check
      _
    $region7: #{tpu_custom_call.1} parent=1 // pred_check_branch
      %22 = sbr.rel (0) target = $region9
    $region8: #{tpu_custom_call.1} parent=1 // pred_region
      %24 = vsyncadd [#allocation6], 0
      %s25 = sshll.u32 %s1, 4
      %s26 = int_to_ptr.hbm [resolvable:$true] %s25
      %s27 = sshll.u32 [#allocation5], 4
      %s28 = int_to_ptr.vmem [resolvable:$true] %s27
      %33 = dma.hbm_to_vmem [thread:$0]  %s26, 256, %s28, [#allocation6], 128, 128, 8
    $region9: #{tpu_custom_call.1} parent=1 // pred_fallthru
      _
    // Predicated region
    $region10: #{tpu_custom_call.1} parent=1 // pred_check
      _
    $region11: #{tpu_custom_call.1} parent=1 // pred_check_branch
      %35 = sbr.rel (0) target = $region13
    $region12: #{tpu_custom_call.1} parent=1 // pred_region
      %37 = dma.done [#allocation3], 128
    $region13: #{tpu_custom_call.1} parent=1 // pred_fallthru
      _
    // Predicated region
    $region14: #{tpu_custom_call.1} parent=1 // pred_check
      _
    $region15: #{tpu_custom_call.1} parent=1 // pred_check_branch
      %39 = sbr.rel (0) target = $region17
    $region16: #{tpu_custom_call.1} parent=1 // pred_region
      %41 = dma.done [#allocation6], 256
    $region17: #{tpu_custom_call.1} parent=1 // pred_fallthru
      _
    %v42 = vld [vmem:[#allocation2] sm:$0xff]
    %v43 = vtanh.pop %v42
    %v44 = vmul.f32 %v43, 0.999
    %v45 = vmul.f32 %v44, 0.5
    %v46 = vadd.f32 %v45, 0.5
    %v47 = vld [vmem:[#allocation5] sm:$0xff]
    %v48 = vld [vmem:[#allocation5 + $0x8] sm:$0xff]
    %vm49 = vcmask 130048
    %v51 = vsel %vm49, %v46, 0
    %53 = vmatpush.msra.mxu0 0.0
    %54 = vmatpush.msra.mxu0 0.0
    %55 = vmatpush.msra.mxu0 0.0
    %56 = vmatpush.msra.mxu0 0.0
    %57 = vmatpush.msra.mxu0 0.0
    %58 = vmatpush.msra.mxu0 0.0
    %59 = vmatpush.msra.mxu0 0.0
    %60 = vmatpush.msra.mxu0 0.0
    %61 = vmatpush.msra.mxu0 0.0
    %62 = vmatpush.msra.mxu0 0.0
    %63 = vmatpush.msra.mxu0 0.0
    %64 = vmatpush.msra.mxu0 0.0
    %65 = vmatpush.msra.mxu0 0.0
    %66 = vmatpush.msra.mxu0 0.0
    %67 = vmatpush.msra.mxu0 %v48
    %68 = vmatpush.msra.mxu0 %v47
    %69 = vmatmul.f32.gmra.mxu0 %v51
    %v70 = vpop.f32.mrf.mxu0
    %v71 = vadd.f32 0.0, %v70
    %72 = vdwg.mxu0
    %73 = vst [vmem:[#allocation7] sm:$0xff] %v71
    // Predicated region
    $region18: #{tpu_custom_call.1} parent=1 // pred_check
      _
    $region19: #{tpu_custom_call.1} parent=1 // pred_check_branch
      %75 = sbr.rel (0) target = $region21
    $region20: #{tpu_custom_call.1} parent=1 // pred_region
      %77 = vsyncadd [#allocation4], 0
      %s79 = sshll.u32 [#allocation7], 4
      %s80 = int_to_ptr.vmem [resolvable:$true] %s79
      %s81 = sshll.u32 %s2, 4
      %s82 = int_to_ptr.hbm [resolvable:$true] %s81
      %84 = dma.vmem_to_hbm [thread:$0]  %s80, 128, %s82, [#allocation4]
    $region21: #{tpu_custom_call.1} parent=1 // pred_fallthru
      _
    // Predicated region
    $region22: #{tpu_custom_call.1} parent=1 // pred_check
      _
    $region23: #{tpu_custom_call.1} parent=1 // pred_check_branch
      %86 = sbr.rel (0) target = $region25
    $region24: #{tpu_custom_call.1} parent=1 // pred_region
      %88 = dma.done [#allocation4], 128
    $region25: #{tpu_custom_call.1} parent=1 // pred_fallthru
      _
    %89 = vsyncpa [#allocation3], 1
    %90 = vsyncpa [#allocation6], 1
    %91 = vsyncpa [#allocation4], 1

</llo_original>
